<compile_context>
chip_gen: v7x
topology: tpu7x:2x2x1
jax: 0.10.0
libtpu: 0.0.40
codegen_flags: <defaults>
</compile_context>

<pallas_src>
import functools

import jax
import jax.numpy as jnp
from jax.experimental import pallas as pl
from jax.experimental.pallas import tpu as pltpu


# ----------------------------- Pallas kernel ------------------------------- #
def split_policy_kernel(
    x_ref,                       # (TB, NI)            compute dtype (bf16 or f32)
    w1_ref, b1_ref,              # (NI, 2H), (1, 2H)   fused actor|critic layer 1
    w2_ref, b2_ref,              # (2H, 2H), (1, 2H)   block-diag fused layer 2
    w3row_ref, b3_ref,           # (1, 2H) [zeros | cw3^T] (f32), (1, 1)
    feat_ref,                    # (TB, H)  actor_actuator features
    val_ref,                     # (TB, 1)  critic value
    *, hidden_size,
):
    x = x_ref[...]

    # Fused layer 1: one 128-lane matmul (actor lanes 0..H-1, critic H..2H-1),
    # f32 accumulation, f32 bias + tanh (VPU/EUP stay in f32 for v5e).
    h1 = jnp.tanh(
        jnp.dot(x, w1_ref[...], preferred_element_type=jnp.float32) + b1_ref[...]
    )
    # Fused layer 2: block-diagonal weight keeps the two branches independent.
    h2 = jnp.tanh(
        jnp.dot(h1.astype(w2_ref.dtype), w2_ref[...],
                preferred_element_type=jnp.float32) + b2_ref[...]
    )

    # Actor features: lanes [0, H).
    feat_ref[...] = h2[:, :hidden_size].astype(feat_ref.dtype)

    # Critic value head as VPU multiply + XLU lane-reduce (no N=1 MXU matmul).
    # w3row is zero over the actor lanes, so only the critic half contributes.
    v = jnp.sum(h2 * w3row_ref[...], axis=-1, keepdims=True) + b3_ref[...]
    val_ref[...] = v.astype(val_ref.dtype)


# --------------------------- one-time param prep ---------------------------- #
def _cdiv(a, b):
    return (a + b - 1) // b


def _round_up(n, m):
    return ((n + m - 1) // m) * m


def prepare_params(params, compute_dtype=jnp.bfloat16):
    """Fuse actor/critic weights ONCE (outside the per-call forward).

    Matmul weights are stored in `compute_dtype` (bf16 -> native MXU path and
    halved DMA bytes); biases / value-head row stay f32.
    """
    H = params["aw1"].shape[1]
    w1 = jnp.concatenate([params["aw1"], params["cw1"]], axis=1)          # (NI, 2H)
    b1 = jnp.concatenate([params["ab1"], params["cb1"]], axis=1)          # (1, 2H)
    zH = jnp.zeros((H, H), jnp.float32)
    w2 = jnp.concatenate(
        [jnp.concatenate([params["aw2"], zH], axis=1),
         jnp.concatenate([zH, params["cw2"]], axis=1)], axis=0)           # (2H, 2H)
    b2 = jnp.concatenate([params["ab2"], params["cb2"]], axis=1)          # (1, 2H)
    w3row = jnp.concatenate([jnp.zeros((1, H), jnp.float32),
                             params["cw3"].T], axis=1)                    # (1, 2H)
    b3 = params["cb3"]                                                    # (1, 1)
    return {
        "w1": w1.astype(compute_dtype),
        "b1": b1.astype(jnp.float32),
        "w2": w2.astype(compute_dtype),
        "b2": b2.astype(jnp.float32),
        "w3row": w3row.astype(jnp.float32),
        "b3": b3.astype(jnp.float32),
    }


def _choose_batch_tile(batch, cap=1024):
    """Pick (tile_rows, padded_total_rows).

    * rows padded only to a multiple of 8 per tile (padding <= 8*num_tiles rows,
      no round-up-to-tile-size blowup).
    * mid-size batches split into >=2 near-equal tiles so the 'parallel' grid
      axis can shard across v7x's two TensorCores (no-op on v5e/v6e).
    * cap keeps per-tile VMEM modest while amortizing the ~0.35us/step cost.
    """
    b8 = _round_up(max(batch, 1), 8)
    if b8 <= 8:
        tb = 8
    elif b8 <= cap:
        tb = _round_up(_cdiv(b8, 2), 8)       # two near-equal tiles
    else:
        tiles = _cdiv(b8, cap)
        tb = _round_up(_cdiv(b8, tiles), 8)   # near-equal tiles <= cap
    n_tiles = _cdiv(b8, tb)
    return tb, n_tiles * tb


# ------------------------------- forward ------------------------------------ #
def split_policy_forward(inputs, rnn_hxs, masks, fused):
    """Returns (value, action_feat, rnn_hxs). `masks` unused (no recurrent path)."""
    del masks  # not used by this module's forward
    B, NI = inputs.shape
    H2 = fused["w1"].shape[1]
    H = H2 // 2
    compute_dtype = fused["w1"].dtype

    TB, B_total = _choose_batch_tile(B)
    x = inputs.astype(compute_dtype)
    if B_total != B:                                   # skip the pad copy if exact
        x = jnp.pad(x, ((0, B_total - B), (0, 0)))
    grid = (B_total // TB,)

    const = lambda i: (0, 0)  # weights/biases: same VMEM-resident block every step
    feat, value = pl.pallas_call(
        functools.partial(split_policy_kernel, hidden_size=H),
        out_shape=(
            jax.ShapeDtypeStruct((B_total, H), jnp.float32),
            jax.ShapeDtypeStruct((B_total, 1), jnp.float32),
        ),
        grid=grid,
        in_specs=[
            pl.BlockSpec((TB, NI), lambda i: (i, 0)),   # x: tiled over batch
            pl.BlockSpec((NI, H2), const),              # w1
            pl.BlockSpec((1, H2), const),               # b1
            pl.BlockSpec((H2, H2), const),              # w2
            pl.BlockSpec((1, H2), const),               # b2
            pl.BlockSpec((1, H2), const),               # w3row
            pl.BlockSpec((1, 1), const),                # b3
        ],
        out_specs=(
            pl.BlockSpec((TB, H), lambda i: (i, 0)),    # action_feat
            pl.BlockSpec((TB, 1), lambda i: (i, 0)),    # value
        ),
        compiler_params=pltpu.CompilerParams(
            dimension_semantics=("parallel",),          # shard batch tiles across TCs
        ),
    )(x, fused["w1"], fused["b1"], fused["w2"], fused["b2"],
      fused["w3row"], fused["b3"])

    if B_total != B:                                    # only strip padded rows
        feat = feat[:B]
        value = value[:B]
    return value.astype(inputs.dtype), feat.astype(inputs.dtype), rnn_hxs


# --------------------------- parameter creation ----------------------------- #
def _orthogonal(key, out_dim, in_dim, gain=1.0):
    """Orthogonal init like torch.nn.init.orthogonal_ for a (out, in) weight."""
    shape = (out_dim, in_dim)
    a = jax.random.normal(key, shape, dtype=jnp.float32)
    transpose = shape[0] < shape[1]
    if transpose:
        a = a.T
    q, r = jnp.linalg.qr(a)
    d = jnp.sign(jnp.diag(r))
    q = q * d[None, :]
    if transpose:
        q = q.T
    return gain * q


def make_params(key, num_inputs, hidden_size=64):
    ks = jax.random.split(key, 5)
    g = float(jnp.sqrt(2.0))
    # stored as [in, out] so the kernel computes x @ W
    return {
        # actor_actuator
        "aw1": _orthogonal(ks[0], hidden_size, num_inputs, g).T,
        "ab1": jnp.zeros((1, hidden_size), jnp.float32),
        "aw2": _orthogonal(ks[1], hidden_size, hidden_size, g).T,
        "ab2": jnp.zeros((1, hidden_size), jnp.float32),
        # critic_full
        "cw1": _orthogonal(ks[2], hidden_size, num_inputs, g).T,
        "cb1": jnp.zeros((1, hidden_size), jnp.float32),
        "cw2": _orthogonal(ks[3], hidden_size, hidden_size, g).T,
        "cb2": jnp.zeros((1, hidden_size), jnp.float32),
        "cw3": _orthogonal(ks[4], 1, hidden_size, 1.0).T,   # final layer gain=1
        "cb3": jnp.zeros((1, 1), jnp.float32),
    }
    # TODO(synk): actor_contact branch is dead code in the PyTorch forward's
    # return, so its parameters are intentionally not materialized here.


# --------------------------------- main ------------------------------------ #
if __name__ == "__main__":
    key = jax.random.PRNGKey(0)
    k_x, k_h, k_p, k_x2 = jax.random.split(key, 4)

    batch = 8
    num_inputs = 32
    hidden_size = 64

    inputs = jax.random.normal(k_x, (batch, num_inputs), dtype=jnp.float32)
    rnn_hxs = jax.random.normal(k_h, (batch, hidden_size), dtype=jnp.float32)
    masks = jnp.ones((batch, 1), dtype=jnp.float32)

    params = make_params(k_p, num_inputs, hidden_size)

    # One-time param fusion, done OUTSIDE the per-call forward.
    fused_bf16 = prepare_params(params, compute_dtype=jnp.bfloat16)
    fused_f32 = prepare_params(params, compute_dtype=jnp.float32)

    fwd = jax.jit(split_policy_forward)

    # Pure-JAX reference (unfused math, outside Pallas).
    def ref(x, p):
        h = jnp.tanh(x @ p["aw1"] + p["ab1"])
        h = jnp.tanh(h @ p["aw2"] + p["ab2"])
        c = jnp.tanh(x @ p["cw1"] + p["cb1"])
        c = jnp.tanh(c @ p["cw2"] + p["cb2"])
        v = c @ p["cw3"] + p["cb3"]
        return v, h

    # --- run 1: small batch, bf16 MXU path (grid=(1,)) ---
    value, action_feat, rnn_hxs_out = fwd(inputs, rnn_hxs, masks, fused_bf16)
    jax.block_until_ready((value, action_feat, rnn_hxs_out))

    v_ref, f_ref = ref(inputs, params)
    assert value.shape == (batch, 1)
    assert action_feat.shape == (batch, hidden_size)
    assert jnp.allclose(value, v_ref, atol=3e-2)          # bf16 matmul tolerance
    assert jnp.allclose(action_feat, f_ref, atol=3e-2)
    assert jnp.array_equal(rnn_hxs_out, rnn_hxs)

    # --- run 2: f32 path, non-divisible batch -> 2 tiles + row padding path ---
    batch2 = 20
    inputs2 = jax.random.normal(k_x2, (batch2, num_inputs), dtype=jnp.float32)
    rnn_hxs2 = jnp.zeros((batch2, hidden_size), dtype=jnp.float32)
    masks2 = jnp.ones((batch2, 1), dtype=jnp.float32)

    value2, feat2, _ = fwd(inputs2, rnn_hxs2, masks2, fused_f32)
    jax.block_until_ready((value2, feat2))

    v_ref2, f_ref2 = ref(inputs2, params)
    assert value2.shape == (batch2, 1)
    assert feat2.shape == (batch2, hidden_size)
    assert jnp.allclose(value2, v_ref2, atol=1e-5)        # f32 path stays tight
    assert jnp.allclose(feat2, f_ref2, atol=1e-5)

    print("KERNEL_OK")
</pallas_src>

<mosaic_0001>
module attributes {stable_mosaic.version = 11 : i64} {
  func.func @split_policy_kernel(%arg0: i32, %arg1: memref<8x32xbf16, #tpu.memory_space<vmem>>, %arg2: memref<32x128xbf16, #tpu.memory_space<vmem>>, %arg3: memref<1x128xf32, #tpu.memory_space<vmem>>, %arg4: memref<128x128xbf16, #tpu.memory_space<vmem>>, %arg5: memref<1x128xf32, #tpu.memory_space<vmem>>, %arg6: memref<1x128xf32, #tpu.memory_space<vmem>>, %arg7: memref<1x1xf32, #tpu.memory_space<vmem>>, %arg8: memref<8x64xf32, #tpu.memory_space<vmem>>, %arg9: memref<8x1xf32, #tpu.memory_space<vmem>>) attributes {dimension_semantics = [#tpu.dimension_semantics<parallel>], iteration_bounds = array<i64: 1>, scalar_prefetch = 0 : i64, scratch_operands = 0 : i64, tpu.core_type = #tpu.core_type<tc>, window_params = [{transform_indices = @transform_0, window_bounds = array<i64: 8, 32>}, {pipeline_mode = #tpu.pipeline_mode<synchronous>, transform_indices = @transform_1, window_bounds = array<i64: 32, 128>}, {pipeline_mode = #tpu.pipeline_mode<synchronous>, transform_indices = @transform_2, window_bounds = array<i64: 1, 128>}, {pipeline_mode = #tpu.pipeline_mode<synchronous>, transform_indices = @transform_3, window_bounds = array<i64: 128, 128>}, {pipeline_mode = #tpu.pipeline_mode<synchronous>, transform_indices = @transform_4, window_bounds = array<i64: 1, 128>}, {pipeline_mode = #tpu.pipeline_mode<synchronous>, transform_indices = @transform_5, window_bounds = array<i64: 1, 128>}, {pipeline_mode = #tpu.pipeline_mode<synchronous>, transform_indices = @transform_6, window_bounds = array<i64: 1, 1>}, {transform_indices = @transform_7, window_bounds = array<i64: 8, 64>}, {transform_indices = @transform_8, window_bounds = array<i64: 8, 1>}]} {
    %c0 = arith.constant 0 : index
    %c0_0 = arith.constant 0 : index
    %0 = vector.load %arg1[%c0, %c0_0] : memref<8x32xbf16, #tpu.memory_space<vmem>>, vector<8x32xbf16>
    %c0_1 = arith.constant 0 : index
    %c0_2 = arith.constant 0 : index
    %1 = vector.load %arg2[%c0_1, %c0_2] : memref<32x128xbf16, #tpu.memory_space<vmem>>, vector<32x128xbf16>
    %cst = arith.constant dense<0.000000e+00> : vector<8x128xf32>
    %2 = tpu.matmul %0, %1, %cst {dimension_numbers = #tpu.dot_dimension_numbers<[1], [0], [0], [1], [0, 0, 1, 1], [], []>} : vector<8x32xbf16>, vector<32x128xbf16>, vector<8x128xf32> -> vector<8x128xf32>
    %c0_3 = arith.constant 0 : index
    %c0_4 = arith.constant 0 : index
    %3 = vector.load %arg3[%c0_3, %c0_4] : memref<1x128xf32, #tpu.memory_space<vmem>>, vector<1x128xf32>
    %4 = vector.broadcast %3 : vector<1x128xf32> to vector<8x128xf32>
    %5 = arith.addf %2, %4 : vector<8x128xf32>
    %6 = math.tanh %5 : vector<8x128xf32>
    %7 = arith.truncf %6 : vector<8x128xf32> to vector<8x128xbf16>
    %c0_5 = arith.constant 0 : index
    %c0_6 = arith.constant 0 : index
    %8 = vector.load %arg4[%c0_5, %c0_6] : memref<128x128xbf16, #tpu.memory_space<vmem>>, vector<128x128xbf16>
    %cst_7 = arith.constant dense<0.000000e+00> : vector<8x128xf32>
    %9 = tpu.matmul %7, %8, %cst_7 {dimension_numbers = #tpu.dot_dimension_numbers<[1], [0], [0], [1], [0, 0, 1, 1], [], []>} : vector<8x128xbf16>, vector<128x128xbf16>, vector<8x128xf32> -> vector<8x128xf32>
    %c0_8 = arith.constant 0 : index
    %c0_9 = arith.constant 0 : index
    %10 = vector.load %arg5[%c0_8, %c0_9] : memref<1x128xf32, #tpu.memory_space<vmem>>, vector<1x128xf32>
    %11 = vector.broadcast %10 : vector<1x128xf32> to vector<8x128xf32>
    %12 = arith.addf %9, %11 : vector<8x128xf32>
    %13 = math.tanh %12 : vector<8x128xf32>
    %14 = vector.extract_strided_slice %13 {offsets = [0, 0], sizes = [8, 64], strides = [1, 1]} : vector<8x128xf32> to vector<8x64xf32>
    %c0_10 = arith.constant 0 : index
    %c0_11 = arith.constant 0 : index
    %15 = vector.load %arg8[%c0_10, %c0_11] : memref<8x64xf32, #tpu.memory_space<vmem>>, vector<8x64xf32>
    tpu.vector_store %arg8[%c0_10, %c0_11], %14 {strides = array<i32>} : memref<8x64xf32, #tpu.memory_space<vmem>>, vector<8x64xf32>,
    %c0_12 = arith.constant 0 : index
    %c0_13 = arith.constant 0 : index
    %16 = vector.load %arg6[%c0_12, %c0_13] : memref<1x128xf32, #tpu.memory_space<vmem>>, vector<1x128xf32>
    %17 = vector.broadcast %16 : vector<1x128xf32> to vector<8x128xf32>
    %18 = arith.mulf %13, %17 : vector<8x128xf32>
    %cst_14 = arith.constant dense<0.000000e+00> : vector<8xf32>
    %19 = vector.multi_reduction <add>, %18, %cst_14 [1] : vector<8x128xf32> to vector<8xf32>
    %20 = vector.shape_cast %19 : vector<8xf32> to vector<8x1xf32>
    %c0_15 = arith.constant 0 : index
    %c0_16 = arith.constant 0 : index
    %21 = vector.load %arg7[%c0_15, %c0_16] : memref<1x1xf32, #tpu.memory_space<vmem>>, vector<1x1xf32>
    %22 = vector.broadcast %21 : vector<1x1xf32> to vector<8x1xf32>
    %23 = arith.addf %20, %22 : vector<8x1xf32>
    %c0_17 = arith.constant 0 : index
    %c0_18 = arith.constant 0 : index
    %24 = vector.load %arg9[%c0_17, %c0_18] : memref<8x1xf32, #tpu.memory_space<vmem>>, vector<8x1xf32>
    tpu.vector_store %arg9[%c0_17, %c0_18], %23 {strides = array<i32>} : memref<8x1xf32, #tpu.memory_space<vmem>>, vector<8x1xf32>,
    return
  }
  func.func @transform_0(%arg0: i32) -> (i32, i32) {
    %c0_i32 = arith.constant 0 : i32
    %c0_i32_0 = arith.constant 0 : i32
    return %arg0, %c0_i32 : i32, i32
  }
  func.func @transform_1(%arg0: i32) -> (i32, i32) {
    %c0_i32 = arith.constant 0 : i32
    %c0_i32_0 = arith.constant 0 : i32
    %c0_i32_1 = arith.constant 0 : i32
    return %c0_i32, %c0_i32_0 : i32, i32
  }
  func.func @transform_2(%arg0: i32) -> (i32, i32) {
    %c0_i32 = arith.constant 0 : i32
    %c0_i32_0 = arith.constant 0 : i32
    %c0_i32_1 = arith.constant 0 : i32
    return %c0_i32, %c0_i32_0 : i32, i32
  }
  func.func @transform_3(%arg0: i32) -> (i32, i32) {
    %c0_i32 = arith.constant 0 : i32
    %c0_i32_0 = arith.constant 0 : i32
    %c0_i32_1 = arith.constant 0 : i32
    return %c0_i32, %c0_i32_0 : i32, i32
  }
  func.func @transform_4(%arg0: i32) -> (i32, i32) {
    %c0_i32 = arith.constant 0 : i32
    %c0_i32_0 = arith.constant 0 : i32
    %c0_i32_1 = arith.constant 0 : i32
    return %c0_i32, %c0_i32_0 : i32, i32
  }
  func.func @transform_5(%arg0: i32) -> (i32, i32) {
    %c0_i32 = arith.constant 0 : i32
    %c0_i32_0 = arith.constant 0 : i32
    %c0_i32_1 = arith.constant 0 : i32
    return %c0_i32, %c0_i32_0 : i32, i32
  }
  func.func @transform_6(%arg0: i32) -> (i32, i32) {
    %c0_i32 = arith.constant 0 : i32
    %c0_i32_0 = arith.constant 0 : i32
    %c0_i32_1 = arith.constant 0 : i32
    return %c0_i32, %c0_i32_0 : i32, i32
  }
  func.func @transform_7(%arg0: i32) -> (i32, i32) {
    %c0_i32 = arith.constant 0 : i32
    %c0_i32_0 = arith.constant 0 : i32
    return %arg0, %c0_i32 : i32, i32
  }
  func.func @transform_8(%arg0: i32) -> (i32, i32) {
    %c0_i32 = arith.constant 0 : i32
    %c0_i32_0 = arith.constant 0 : i32
    return %arg0, %c0_i32 : i32, i32
  }
}

</mosaic_0001>

<llo_original>
// kernel: split_policy_forward.1
$region0: #{split_policy_forward.1}
  #allocation0 [shape = 'u32[]', space=smem, size = 0x4, offset = 0x4, fixed_abs, tag = 'smem constant byte address 0x4 - core index']
  #allocation1 [shape = 'u32[144,128]{1,0:T(1,128)}', space=vmem, size = 0x12000, scoped, tag = 'internal scratch']
  #allocation2 [shape = 'f32[1,1]{1,0:T(1,128)S(1)}', space=vmem, size = 0x200, scoped, tag = 'scoped memory for split_policy_forward.1']
  %s0 = inlined_call_operand.vmem [shape: bf16[8,32], index: 0, kind: input, shape index: {}]
  %s1 = inlined_call_operand.vmem [shape: bf16[32,128], index: 1, kind: input, shape index: {}]
  %s2 = inlined_call_operand.vmem [shape: f32[1,128], index: 2, kind: input, shape index: {}]
  %s3 = inlined_call_operand.hbm [shape: bf16[128,128], index: 3, kind: input, shape index: {}]
  %s4 = inlined_call_operand.vmem [shape: f32[1,128], index: 4, kind: input, shape index: {}]
  %s5 = inlined_call_operand.vmem [shape: f32[1,128], index: 5, kind: input, shape index: {}]
  %s6 = inlined_call_operand.<no memory space> [shape: f32[1,1], index: 6, kind: input, shape index: {}]
  %s7 = inlined_call_operand.hbm [shape: f32[8,64], index: 7, kind: output, shape index: {0}]
  %s8 = inlined_call_operand.vmem [shape: f32[8,1], index: 8, kind: output, shape index: {1}]
  %9 = xla_tuple %s7, %s8
  %s10 = sld [smem:[#allocation0]]
  $region50: #{split_policy_forward.1} parent=0
    _
  %s12 = ssub.s32 1, %s10
  %s13 = scalar_select 0, %s12, %s10
  %v14 = vstv %s6
  %15 = vst [vmem:[#allocation2] sm:$0x1] %v14
  $region1: #{split_policy_forward.1} parent=0
    #allocation3 [shape = 'u8[32768]{0}', space=vmem, size = 0x8000, scoped, tag = 'input window, operand 3, single buffered']
    #allocation4 [shape = 's32[1]{0}', space=sflag, size = 0x4, scoped, tag = 'scoped memory for split_policy_forward.1']
    #allocation5 [shape = 's32[1]{0}', space=sflag, size = 0x4, scoped, tag = 'scoped memory for split_policy_forward.1']
    #allocation6 [shape = 'u8[4096]{0}', space=vmem, size = 0x1000, scoped, tag = 'output window, operand 0, single buffered']
    %16 = vsyncpa [#allocation4], 0
    %17 = vsyncpa [#allocation5], 0
    // Predicated region
    $region2: #{split_policy_forward.1} parent=1 // pred_check
      _
    $region3: #{split_policy_forward.1} parent=1 // pred_check_branch
      %19 = sbr.rel (0) target = $region5
    $region4: #{split_policy_forward.1} parent=1 // pred_region
      _
    $region5: #{split_policy_forward.1} parent=1 // pred_fallthru
      _
    // Predicated region
    $region6: #{split_policy_forward.1} parent=1 // pred_check
      _
    $region7: #{split_policy_forward.1} parent=1 // pred_check_branch
      %21 = sbr.rel (0) target = $region9
    $region8: #{split_policy_forward.1} parent=1 // pred_region
      _
    $region9: #{split_policy_forward.1} parent=1 // pred_fallthru
      _
    // Predicated region
    $region10: #{split_policy_forward.1} parent=1 // pred_check
      _
    $region11: #{split_policy_forward.1} parent=1 // pred_check_branch
      %23 = sbr.rel (0) target = $region13
    $region12: #{split_policy_forward.1} parent=1 // pred_region
      _
    $region13: #{split_policy_forward.1} parent=1 // pred_fallthru
      _
    // Predicated region
    $region14: #{split_policy_forward.1} parent=1 // pred_check
      _
    $region15: #{split_policy_forward.1} parent=1 // pred_check_branch
      %25 = sbr.rel (0) target = $region17
    $region16: #{split_policy_forward.1} parent=1 // pred_region
      %s27 = ssub.s32 1024, 1024
      %28 = vsyncadd [#allocation4], %s27
      %s29 = sshll.u32 [#allocation3], 4
      %s30 = int_to_ptr.vmem [resolvable:$true] %s29
      %35 = dma.hbm_to_vmem [thread:$0]  %s3, 1024, %s30, [#allocation4], 64, 64, 4
    $region17: #{split_policy_forward.1} parent=1 // pred_fallthru
      _
    // Predicated region
    $region18: #{split_policy_forward.1} parent=1 // pred_check
      _
    $region19: #{split_policy_forward.1} parent=1 // pred_check_branch
      %37 = sbr.rel (0) target = $region21
    $region20: #{split_policy_forward.1} parent=1 // pred_region
      _
    $region21: #{split_policy_forward.1} parent=1 // pred_fallthru
      _
    // Predicated region
    $region22: #{split_policy_forward.1} parent=1 // pred_check
      _
    $region23: #{split_policy_forward.1} parent=1 // pred_check_branch
      %39 = sbr.rel (0) target = $region25
    $region24: #{split_policy_forward.1} parent=1 // pred_region
      _
    $region25: #{split_policy_forward.1} parent=1 // pred_fallthru
      _
    // Predicated region
    $region26: #{split_policy_forward.1} parent=1 // pred_check
      _
    $region27: #{split_policy_forward.1} parent=1 // pred_check_branch
      %41 = sbr.rel (0) target = $region29
    $region28: #{split_policy_forward.1} parent=1 // pred_region
      _
    $region29: #{split_policy_forward.1} parent=1 // pred_fallthru
      _
    // Predicated region
    $region30: #{split_policy_forward.1} parent=1 // pred_check
      _
    $region31: #{split_policy_forward.1} parent=1 // pred_check_branch
      %43 = sbr.rel (0) target = $region33
    $region32: #{split_policy_forward.1} parent=1 // pred_region
      %44 = dma.done [#allocation4], 1024
    $region33: #{split_policy_forward.1} parent=1 // pred_fallthru
      _
    %v46 = vld [vmem:[%s0] sm:$0xf]
    %v47 = vld [vmem:[%s1] sm:$0xf]
    %v48 = vld [vmem:[%s1 + $0x4] sm:$0xf]
    %v49 = vld [vmem:[%s1 + $0x8] sm:$0xf]
    %v50 = vld [vmem:[%s1 + $0xc] sm:$0xf]
    %v51 = vld [vmem:[%s2] sm:$0x1]
    %v53 = vlaneseq
    %v54 = vshrl.u32 %v53, 7
    %v55 = vsub.s32 0, %v54
    %v56 = vrot.slane %v51, %v55
    %v62 = vunpack.c.l.b16 %v47
    %v63 = vunpack.c.l.b16 %v48
    %v64 = vunpack.c.l.b16 %v49
    %v65 = vunpack.c.l.b16 %v50
    %v66 = vpack.c.b16 %v63, %v62
    %v67 = vpack.c.b16 %v65, %v64
    %vm70 = vcmask 261120
    %v72 = vsel %vm70, %v46, 0
    %74 = vmatprep.subr.bf16.mxu0 0
    %75 = vmatpush1.bf16.msra.mxu0 %v66
    %76 = vmatprep.subr.bf16.mxu0 0
    %77 = vmatpush1.bf16.msra.mxu0 %v67
    %78 = vmatprep.subr.bf16.mxu0 0
    %79 = vmatpush1.bf16.msra.mxu0 0
    %80 = vmatprep.subr.bf16.mxu0 0
    %81 = vmatpush1.bf16.msra.mxu0 0
    %82 = vmatprep.subr.bf16.mxu0 0
    %83 = vmatpush1.bf16.msra.mxu0 0
    %84 = vmatprep.subr.bf16.mxu0 0
    %85 = vmatpush1.bf16.msra.mxu0 0
    %86 = vmatprep.subr.bf16.mxu0 0
    %87 = vmatpush1.bf16.msra.mxu0 0
    %88 = vmatprep.subr.bf16.mxu0 0
    %89 = vmatpush1.bf16.msra.mxu0 0
    %90 = vmatprep.subr.bf16.mxu0 0
    %91 = vmatpush1.bf16.msra.mxu0 0
    %92 = vmatprep.subr.bf16.mxu0 0
    %93 = vmatpush1.bf16.msra.mxu0 0
    %94 = vmatprep.subr.bf16.mxu0 0
    %95 = vmatpush1.bf16.msra.mxu0 0
    %96 = vmatprep.subr.bf16.mxu0 0
    %97 = vmatpush1.bf16.msra.mxu0 0
    %98 = vmatprep.subr.bf16.mxu0 0
    %99 = vmatpush1.bf16.msra.mxu0 0
    %100 = vmatprep.subr.bf16.mxu0 0
    %101 = vmatpush1.bf16.msra.mxu0 0
    %102 = vmatprep.subr.bf16.mxu0 0
    %103 = vmatpush1.bf16.msra.mxu0 0
    %104 = vmatprep.subr.bf16.mxu0 0
    %105 = vmatpush1.bf16.msra.mxu0 0
    %106 = vmatprep.mubr.bf16.mxu0 0
    %107 = vmatmul.mubr.bf16.gmra.mrb[0].mxu0 %v72
    %v108 = vpop.f32.mrb[0].mxu0
    %v109 = vadd.f32 %v56, %v108
    %v110 = vpop.f32.mrb[0].mxu0
    %v111 = vpop.f32.mrb[0].mxu0
    %v112 = vpop.f32.mrb[0].mxu0
    %113 = vdwg.mxu0
    %v114 = vtanh.pop %v109
    %v115 = vpack.c.bf16 %v114, %v114
    %v116 = vld [vmem:[#allocation3] sm:$0xf]
    %v117 = vld [vmem:[#allocation3 + $0x4] sm:$0xf]
    %v118 = vld [vmem:[#allocation3 + $0x8] sm:$0xf]
    %v119 = vld [vmem:[#allocation3 + $0xc] sm:$0xf]
    %v120 = vld [vmem:[#allocation3 + $0x10] sm:$0xf]
    %v121 = vld [vmem:[#allocation3 + $0x14] sm:$0xf]
    %v122 = vld [vmem:[#allocation3 + $0x18] sm:$0xf]
    %v123 = vld [vmem:[#allocation3 + $0x1c] sm:$0xf]
    %v124 = vld [vmem:[#allocation3 + $0x20] sm:$0xf]
    %v125 = vld [vmem:[#allocation3 + $0x24] sm:$0xf]
    %v126 = vld [vmem:[#allocation3 + $0x28] sm:$0xf]
    %v127 = vld [vmem:[#allocation3 + $0x2c] sm:$0xf]
    %v128 = vld [vmem:[#allocation3 + $0x30] sm:$0xf]
    %v129 = vld [vmem:[#allocation3 + $0x34] sm:$0xf]
    %v130 = vld [vmem:[#allocation3 + $0x38] sm:$0xf]
    %v131 = vld [vmem:[#allocation3 + $0x3c] sm:$0xf]
    %v132 = vld [vmem:[%s4] sm:$0x1]
    %v134 = vlaneseq
    %v135 = vshrl.u32 %v134, 7
    %v136 = vsub.s32 0, %v135
    %v137 = vrot.slane %v132, %v136
    %v155 = vunpack.c.l.b16 %v116
    %v156 = vunpack.c.l.b16 %v117
    %v157 = vunpack.c.l.b16 %v118
    %v158 = vunpack.c.l.b16 %v119
    %v159 = vunpack.c.l.b16 %v120
    %v160 = vunpack.c.l.b16 %v121
    %v161 = vunpack.c.l.b16 %v122
    %v162 = vunpack.c.l.b16 %v123
    %v163 = vunpack.c.l.b16 %v124
    %v164 = vunpack.c.l.b16 %v125
    %v165 = vunpack.c.l.b16 %v126
    %v166 = vunpack.c.l.b16 %v127
    %v167 = vunpack.c.l.b16 %v128
    %v168 = vunpack.c.l.b16 %v129
    %v169 = vunpack.c.l.b16 %v130
    %v170 = vunpack.c.l.b16 %v131
    %v171 = vpack.c.b16 %v156, %v155
    %v172 = vpack.c.b16 %v158, %v157
    %v173 = vpack.c.b16 %v160, %v159
    %v174 = vpack.c.b16 %v162, %v161
    %v175 = vpack.c.b16 %v164, %v163
    %v176 = vpack.c.b16 %v166, %v165
    %v177 = vpack.c.b16 %v168, %v167
    %v178 = vpack.c.b16 %v170, %v169
    %187 = vmatprep.subr.bf16.mxu0 0
    %188 = vmatpush1.bf16.msra.mxu0 %v171
    %189 = vmatprep.subr.bf16.mxu0 0
    %190 = vmatpush1.bf16.msra.mxu0 %v172
    %191 = vmatprep.subr.bf16.mxu0 0
    %192 = vmatpush1.bf16.msra.mxu0 %v173
    %193 = vmatprep.subr.bf16.mxu0 0
    %194 = vmatpush1.bf16.msra.mxu0 %v174
    %195 = vmatprep.subr.bf16.mxu0 0
    %196 = vmatpush1.bf16.msra.mxu0 %v175
    %197 = vmatprep.subr.bf16.mxu0 0
    %198 = vmatpush1.bf16.msra.mxu0 %v176
    %199 = vmatprep.subr.bf16.mxu0 0
    %200 = vmatpush1.bf16.msra.mxu0 %v177
    %201 = vmatprep.subr.bf16.mxu0 0
    %202 = vmatpush1.bf16.msra.mxu0 %v178
    %203 = vmatprep.subr.bf16.mxu0 0
    %204 = vmatpush1.bf16.msra.mxu0 0
    %205 = vmatprep.subr.bf16.mxu0 0
    %206 = vmatpush1.bf16.msra.mxu0 0
    %207 = vmatprep.subr.bf16.mxu0 0
    %208 = vmatpush1.bf16.msra.mxu0 0
    %209 = vmatprep.subr.bf16.mxu0 0
    %210 = vmatpush1.bf16.msra.mxu0 0
    %211 = vmatprep.subr.bf16.mxu0 0
    %212 = vmatpush1.bf16.msra.mxu0 0
    %213 = vmatprep.subr.bf16.mxu0 0
    %214 = vmatpush1.bf16.msra.mxu0 0
    %215 = vmatprep.subr.bf16.mxu0 0
    %216 = vmatpush1.bf16.msra.mxu0 0
    %217 = vmatprep.subr.bf16.mxu0 0
    %218 = vmatpush1.bf16.msra.mxu0 0
    %219 = vmatprep.mubr.bf16.mxu0 0
    %220 = vmatmul.mubr.bf16.gmra.mrb[0].mxu0 %v115
    %v221 = vpop.f32.mrb[0].mxu0
    %v222 = vadd.f32 %v137, %v221
    %v223 = vpop.f32.mrb[0].mxu0
    %v224 = vpop.f32.mrb[0].mxu0
    %v225 = vpop.f32.mrb[0].mxu0
    %226 = vdwg.mxu0
    %v227 = vtanh.pop %v222
    %vm228 = vcmask 523264
    %229 = vst.msk [vmem:[#allocation6] sm:$0xff] %vm228, %v227
    %v230 = vld [vmem:[%s5] sm:$0x1]
    %v232 = vlaneseq
    %v233 = vshrl.u32 %v232, 7
    %v234 = vsub.s32 0, %v233
    %v235 = vrot.slane %v230, %v234
    %v237 = vmul.f32 %v227, %v235
    %238 = vadd.xlane.f32.xlu0 %v237
    %v239 = vpop.xlane.xlu0 %238
    %v240 = vld [vmem:[#allocation2] sm:$0x1]
    %v242 = vlaneseq
    %v243 = vshrl.u32 %v242, 7
    %v244 = vsub.s32 0, %v243
    %v245 = vrot.slane %v240, %v244
    %v247 = vadd.f32 %v239, %v245
    %vm248 = vcmask 7168
    %249 = vst.msk [vmem:[%s8] sm:$0xff] %vm248, %v247
    // Predicated region
    $region34: #{split_policy_forward.1} parent=1 // pred_check
      _
    $region35: #{split_policy_forward.1} parent=1 // pred_check_branch
      %251 = sbr.rel (0) target = $region37
    $region36: #{split_policy_forward.1} parent=1 // pred_region
      %s253 = ssub.s32 128, 128
      %254 = vsyncadd [#allocation5], %s253
      %s256 = sshll.u32 [#allocation6], 4
      %s257 = int_to_ptr.vmem [resolvable:$true] %s256
      %259 = dma.vmem_to_hbm [thread:$0]  %s257, 128, %s7, [#allocation5]
    $region37: #{split_policy_forward.1} parent=1 // pred_fallthru
      _
    // Predicated region
    $region38: #{split_policy_forward.1} parent=1 // pred_check
      _
    $region39: #{split_policy_forward.1} parent=1 // pred_check_branch
      %261 = sbr.rel (0) target = $region41
    $region40: #{split_policy_forward.1} parent=1 // pred_region
      _
    $region41: #{split_policy_forward.1} parent=1 // pred_fallthru
      _
    // Predicated region
    $region42: #{split_policy_forward.1} parent=1 // pred_check
      _
    $region43: #{split_policy_forward.1} parent=1 // pred_check_branch
      %263 = sbr.rel (0) target = $region45
    $region44: #{split_policy_forward.1} parent=1 // pred_region
      %264 = dma.done [#allocation5], 128
    $region45: #{split_policy_forward.1} parent=1 // pred_fallthru
      _
    // Predicated region
    $region46: #{split_policy_forward.1} parent=1 // pred_check
      _
    $region47: #{split_policy_forward.1} parent=1 // pred_check_branch
      %266 = sbr.rel (0) target = $region49
    $region48: #{split_policy_forward.1} parent=1 // pred_region
      _
    $region49: #{split_policy_forward.1} parent=1 // pred_fallthru
      _
    %267 = vsyncpa [#allocation4], 1
    %268 = vsyncpa [#allocation5], 1

</llo_original>
